<compile_context>
chip_gen: v5e
topology: v5e:2x2
jax: 0.10.0
libtpu: 0.0.40
codegen_flags: <defaults>
</compile_context>

<pallas_src>
import jax
import jax.numpy as jnp
from jax.experimental import pallas as pl
from jax.experimental.pallas import tpu as pltpu


def _classifier2_kernel(x_ref, scale_ref, shift_ref, w_ref, cls_ref, l2_ref):
    """One (batch-tile, class-tile) step: folded-BN -> bf16 matmul -> L2 norm."""
    x = x_ref[...]                                          # (tb, D)  f32

    # --- eval-mode BatchNorm, folded: bn = x * scale + shift -----------------
    bn = x * scale_ref[...] + shift_ref[...]

    # --- Linear classifier (no bias): bf16 operands, f32 MXU accumulate ------
    cls_ref[...] = jnp.dot(
        bn.astype(jnp.bfloat16), w_ref[...],
        preferred_element_type=jnp.float32,
    ).astype(cls_ref.dtype)

    # --- L2-normalize the ORIGINAL features (f32), once per batch tile -------
    @pl.when(pl.program_id(1) == 0)
    def _():
        ssq = jnp.sum(x * x, axis=-1, keepdims=True)        # (tb, 1)
        inv = jax.lax.rsqrt(jnp.maximum(ssq, 1e-30))        # guard all-zero rows
        l2_ref[...] = (x * inv).astype(l2_ref.dtype)


def prepare_classifier2_params(weight, gamma, beta, running_mean, running_var,
                               *, eps=1e-5, class_align=128):
    """Hoisted, call ONCE at parameter-load time (not per forward call).

    weight: [C, D] torch Linear layout. Returns folded BN scale/shift (f32),
    a bf16 [D, Cp] transposed+padded weight, and the true class count.
    """
    C, D = weight.shape
    var = running_var.astype(jnp.float32)
    scale = gamma.astype(jnp.float32) * jax.lax.rsqrt(var + eps)      # [D]
    shift = beta.astype(jnp.float32) - running_mean.astype(jnp.float32) * scale

    w_t = jnp.asarray(weight, jnp.float32).T.astype(jnp.bfloat16)     # [D, C]
    Cp = class_align * (-(-C // class_align))
    if Cp != C:
        w_t = jnp.pad(w_t, ((0, 0), (0, Cp - C)))                     # lane-dense

    return {
        "scale": scale.reshape(1, D),
        "shift": shift.reshape(1, D),
        "w_t": w_t,
        "num_classes": int(C),
    }


def _pick_batch_tile(B, max_tile):
    """8-aligned divisor of B (no padding). None => caller must pad."""
    if B <= max_tile:
        if B >= 16 and B % 16 == 0:
            return B // 2          # >=2 batch grid steps -> both v7x TensorCores
        return B                   # single full-extent block (always legal)
    t = max_tile - (max_tile % 8)
    while t >= 8:
        if B % t == 0:
            return t
        t -= 8
    return None


def _pick_class_tile(Cp, max_tile):
    """128-aligned divisor of Cp (Cp is already a multiple of 128)."""
    if Cp <= max_tile:
        return Cp
    t = max_tile - (max_tile % 128)
    while t >= 128:
        if Cp % t == 0:
            return t
        t -= 128
    return 128


def classifier2_forward(features, params, *, max_batch_tile=512,
                        max_class_tile=2048):
    """features: [B, D] f32. Returns (cls_score [B, C], l2_features [B, D])."""
    B, D = features.shape
    scale, shift, w_t = params["scale"], params["shift"], params["w_t"]
    C = params["num_classes"]
    Dw, Cp = w_t.shape
    assert Dw == D, (Dw, D)

    # ---- batch tiling: avoid the full padded copy whenever B allows it ------
    x = features.astype(jnp.float32)
    tb = _pick_batch_tile(B, max_batch_tile)
    if tb is None:
        # TODO(synk): replace this padded copy with in-kernel masked stores for
        # ragged batch sizes (extra HBM read+write of [B, D]); rare path.
        tb = max_batch_tile
        Bp = tb * (-(-B // tb))
        x = jnp.zeros((Bp, D), jnp.float32).at[:B].set(x)
    else:
        Bp = B
    n_b = Bp // tb

    # ---- class tiling (needed when bf16 W^T tile would stress v7x VMEM) -----
    tc = _pick_class_tile(Cp, max_class_tile)
    n_c = Cp // tc

    # ---- VMEM budget / compiler params --------------------------------------
    vmem_est = (
        2 * tb * D * 4                                  # x tile (double buffered)
        + 2 * 2 * D * 4                                 # scale + shift
        + (1 if n_c == 1 else 2) * D * tc * 2           # bf16 weight tile
        + 2 * tb * tc * 4                               # cls tile
        + 2 * tb * D * 4                                # l2 tile
    )
    cp_kwargs = dict(dimension_semantics=("parallel", "arbitrary"))
    if vmem_est > 12 * 1024 * 1024:
        cp_kwargs["vmem_limit_bytes"] = min(vmem_est * 3 // 2, 64 * 1024 * 1024)

    flops = 2 * Bp * D * Cp + 6 * Bp * D
    bytes_accessed = (
        4 * Bp * D                                      # features read
        + 2 * D * Cp * (n_b if n_c > 1 else 1)          # bf16 weight read(s)
        + 4 * Bp * Cp                                   # cls write
        + 4 * Bp * D                                    # l2 write
        + 2 * 4 * D                                     # scale + shift
    )

    # Grid-invariant weight block (class axis untiled): single-buffer it.
    w_spec_kwargs = {}
    if n_c == 1:
        w_spec_kwargs["pipeline_mode"] = pl.Buffered(1)

    cls_p, l2 = pl.pallas_call(
        _classifier2_kernel,
        out_shape=(
            jax.ShapeDtypeStruct((Bp, Cp), jnp.float32),
            jax.ShapeDtypeStruct((Bp, D), features.dtype),
        ),
        grid=(n_b, n_c),
        in_specs=[
            pl.BlockSpec((tb, D), lambda i, j: (i, 0)),            # features tile
            pl.BlockSpec((1, D), lambda i, j: (0, 0)),             # BN scale
            pl.BlockSpec((1, D), lambda i, j: (0, 0)),             # BN shift
            pl.BlockSpec((D, tc), lambda i, j: (0, j),             # bf16 W^T tile
                         **w_spec_kwargs),
        ],
        out_specs=(
            pl.BlockSpec((tb, tc), lambda i, j: (i, j)),           # cls_score
            pl.BlockSpec((tb, D), lambda i, j: (i, 0)),            # l2 features
        ),
        compiler_params=pltpu.CompilerParams(**cp_kwargs),
        cost_estimate=pl.CostEstimate(
            flops=flops, transcendentals=Bp, bytes_accessed=bytes_accessed),
    )(x, scale, shift, w_t)

    cls = cls_p[:, :C] if Cp != C else cls_p
    if Bp != B:
        cls = cls[:B]
        l2 = l2[:B]
    return cls, l2


if __name__ == "__main__":
    key = jax.random.PRNGKey(0)
    k_feat, k_w, k_m, k_v = jax.random.split(key, 4)

    batch = 2
    feat_dim = 1024   # fixed by the module: BatchNorm1d(1024), Linear(1024, pid_num)
    pid_num = 128     # small, lane-dense identity count for the test

    features = jax.random.normal(k_feat, (batch, feat_dim), dtype=jnp.float32)

    # classifier: Linear(1024, pid_num, bias=False), weights ~ N(0, 0.001)
    weight = 0.001 * jax.random.normal(k_w, (pid_num, feat_dim), dtype=jnp.float32)

    # BatchNorm1d after weights_init_kaiming: gamma=1, beta=0; non-trivial
    # running stats to exercise the BN math.
    gamma = jnp.ones((feat_dim,), jnp.float32)
    beta = jnp.zeros((feat_dim,), jnp.float32)
    running_mean = 0.1 * jax.random.normal(k_m, (feat_dim,), dtype=jnp.float32)
    running_var = 1.0 + 0.1 * jax.random.uniform(k_v, (feat_dim,), dtype=jnp.float32)

    eps = 1e-5
    params = prepare_classifier2_params(
        weight, gamma, beta, running_mean, running_var, eps=eps)

    cls_score, l2_feat = classifier2_forward(features, params)
    cls_score, l2_feat = jax.block_until_ready((cls_score, l2_feat))

    # Pure-JAX reference (same eval-mode BN semantics, f32 matmul).
    inv_std = 1.0 / jnp.sqrt(running_var + eps)
    bn_ref = (features - running_mean) * inv_std * gamma + beta
    cls_ref = jnp.dot(bn_ref, weight.T, precision=jax.lax.Precision.HIGHEST)
    l2_ref = features / jnp.sqrt(jnp.sum(features ** 2, axis=-1, keepdims=True))

    assert cls_score.shape == (batch, pid_num)
    assert l2_feat.shape == (batch, feat_dim)
    # Classifier path runs in bf16 (review item 1); tolerance covers the cast.
    assert jnp.allclose(cls_score, cls_ref, rtol=2e-2, atol=2e-3), (
        "cls max abs err", float(jnp.max(jnp.abs(cls_score - cls_ref))))
    assert jnp.allclose(l2_feat, l2_ref, rtol=1e-4, atol=1e-6), (
        "l2 max abs err", float(jnp.max(jnp.abs(l2_feat - l2_ref))))

    print("KERNEL_OK")
</pallas_src>

<mosaic_0001>
module attributes {stable_mosaic.version = 11 : i64} {
  func.func @_classifier2_kernel(%arg0: i32, %arg1: i32, %arg2: memref<2x1024xf32, #tpu.memory_space<vmem>>, %arg3: memref<1x1024xf32, #tpu.memory_space<vmem>>, %arg4: memref<1x1024xf32, #tpu.memory_space<vmem>>, %arg5: memref<1024x128xbf16, #tpu.memory_space<vmem>>, %arg6: memref<2x128xf32, #tpu.memory_space<vmem>>, %arg7: memref<2x1024xf32, #tpu.memory_space<vmem>>) attributes {dimension_semantics = [#tpu.dimension_semantics<parallel>, #tpu.dimension_semantics<arbitrary>], iteration_bounds = array<i64: 1, 1>, scalar_prefetch = 0 : i64, scratch_operands = 0 : i64, tpu.core_type = #tpu.core_type<tc>, window_params = [{transform_indices = @transform_0, window_bounds = array<i64: 2, 1024>}, {pipeline_mode = #tpu.pipeline_mode<synchronous>, transform_indices = @transform_1, window_bounds = array<i64: 1, 1024>}, {pipeline_mode = #tpu.pipeline_mode<synchronous>, transform_indices = @transform_2, window_bounds = array<i64: 1, 1024>}, {pipeline_mode = #tpu.pipeline_mode<synchronous>, transform_indices = @transform_3, window_bounds = array<i64: 1024, 128>}, {transform_indices = @transform_4, window_bounds = array<i64: 2, 128>}, {transform_indices = @transform_5, window_bounds = array<i64: 2, 1024>}]} {
    %c0 = arith.constant 0 : index
    %c0_0 = arith.constant 0 : index
    %0 = vector.load %arg2[%c0, %c0_0] : memref<2x1024xf32, #tpu.memory_space<vmem>>, vector<2x1024xf32>
    %c0_1 = arith.constant 0 : index
    %c0_2 = arith.constant 0 : index
    %1 = vector.load %arg3[%c0_1, %c0_2] : memref<1x1024xf32, #tpu.memory_space<vmem>>, vector<1x1024xf32>
    %2 = vector.broadcast %1 : vector<1x1024xf32> to vector<2x1024xf32>
    %3 = arith.mulf %0, %2 : vector<2x1024xf32>
    %c0_3 = arith.constant 0 : index
    %c0_4 = arith.constant 0 : index
    %4 = vector.load %arg4[%c0_3, %c0_4] : memref<1x1024xf32, #tpu.memory_space<vmem>>, vector<1x1024xf32>
    %5 = vector.broadcast %4 : vector<1x1024xf32> to vector<2x1024xf32>
    %6 = arith.addf %3, %5 : vector<2x1024xf32>
    %7 = arith.truncf %6 : vector<2x1024xf32> to vector<2x1024xbf16>
    %c0_5 = arith.constant 0 : index
    %c0_6 = arith.constant 0 : index
    %8 = vector.load %arg5[%c0_5, %c0_6] : memref<1024x128xbf16, #tpu.memory_space<vmem>>, vector<1024x128xbf16>
    %cst = arith.constant dense<0.000000e+00> : vector<2x128xf32>
    %9 = tpu.matmul %7, %8, %cst {dimension_numbers = #tpu.dot_dimension_numbers<[1], [0], [0], [1], [0, 0, 1, 1], [], []>} : vector<2x1024xbf16>, vector<1024x128xbf16>, vector<2x128xf32> -> vector<2x128xf32>
    %c0_7 = arith.constant 0 : index
    %c0_8 = arith.constant 0 : index
    %10 = vector.load %arg6[%c0_7, %c0_8] : memref<2x128xf32, #tpu.memory_space<vmem>>, vector<2x128xf32>
    tpu.vector_store %arg6[%c0_7, %c0_8], %9 {strides = array<i32>} : memref<2x128xf32, #tpu.memory_space<vmem>>, vector<2x128xf32>,
    %c0_i32 = arith.constant 0 : i32
    %11 = arith.cmpi eq, %arg1, %c0_i32 : i32
    %12 = arith.extui %11 : i1 to i32
    %c0_i32_9 = arith.constant 0 : i32
    %13 = arith.cmpi ne, %12, %c0_i32_9 : i32
    scf.if %13 {
      %14 = arith.mulf %0, %0 : vector<2x1024xf32>
      %cst_10 = arith.constant dense<0.000000e+00> : vector<2xf32>
      %15 = vector.multi_reduction <add>, %14, %cst_10 [1] : vector<2x1024xf32> to vector<2xf32>
      %16 = vector.shape_cast %15 : vector<2xf32> to vector<2x1xf32>
      %cst_11 = arith.constant 1.000000e-30 : f32
      %17 = vector.broadcast %cst_11 : f32 to vector<2x1xf32>
      %18 = arith.maximumf %16, %17 : vector<2x1xf32>
      %19 = math.rsqrt %18 : vector<2x1xf32>
      %20 = vector.broadcast %19 : vector<2x1xf32> to vector<2x1024xf32>
      %21 = arith.mulf %0, %20 : vector<2x1024xf32>
      %c0_12 = arith.constant 0 : index
      %c0_13 = arith.constant 0 : index
      %22 = vector.load %arg7[%c0_12, %c0_13] : memref<2x1024xf32, #tpu.memory_space<vmem>>, vector<2x1024xf32>
      tpu.vector_store %arg7[%c0_12, %c0_13], %21 {strides = array<i32>} : memref<2x1024xf32, #tpu.memory_space<vmem>>, vector<2x1024xf32>,
    } else {
    }
    return
  }
  func.func @transform_0(%arg0: i32, %arg1: i32) -> (i32, i32) {
    %c0_i32 = arith.constant 0 : i32
    %c0_i32_0 = arith.constant 0 : i32
    return %arg0, %c0_i32 : i32, i32
  }
  func.func @transform_1(%arg0: i32, %arg1: i32) -> (i32, i32) {
    %c0_i32 = arith.constant 0 : i32
    %c0_i32_0 = arith.constant 0 : i32
    %c0_i32_1 = arith.constant 0 : i32
    return %c0_i32, %c0_i32_0 : i32, i32
  }
  func.func @transform_2(%arg0: i32, %arg1: i32) -> (i32, i32) {
    %c0_i32 = arith.constant 0 : i32
    %c0_i32_0 = arith.constant 0 : i32
    %c0_i32_1 = arith.constant 0 : i32
    return %c0_i32, %c0_i32_0 : i32, i32
  }
  func.func @transform_3(%arg0: i32, %arg1: i32) -> (i32, i32) {
    %c0_i32 = arith.constant 0 : i32
    %c0_i32_0 = arith.constant 0 : i32
    return %c0_i32, %arg1 : i32, i32
  }
  func.func @transform_4(%arg0: i32, %arg1: i32) -> (i32, i32) {
    %c0_i32 = arith.constant 0 : i32
    return %arg0, %arg1 : i32, i32
  }
  func.func @transform_5(%arg0: i32, %arg1: i32) -> (i32, i32) {
    %c0_i32 = arith.constant 0 : i32
    %c0_i32_0 = arith.constant 0 : i32
    return %arg0, %c0_i32 : i32, i32
  }
}

</mosaic_0001>

<llo_original>
// kernel: tpu_custom_call.1
$region0: #{tpu_custom_call.1}
  #allocation0 [shape = 'u32[]', space=smem, size = 0x4, offset = 0x4, fixed_abs, tag = 'smem constant byte address 0x4 - core index']
  #allocation1 [shape = 'u32[72,128]{1,0:T(1,128)}', space=vmem, size = 0x9000, scoped, tag = 'internal scratch']
  %s0 = inlined_call_operand.hbm [shape: f32[2,1024], index: 0, kind: input, shape index: {}]
  %s1 = inlined_call_operand.hbm [shape: f32[1,1024], index: 1, kind: input, shape index: {}]
  %s2 = inlined_call_operand.hbm [shape: f32[1,1024], index: 2, kind: input, shape index: {}]
  %s3 = inlined_call_operand.hbm [shape: bf16[1024,128], index: 3, kind: input, shape index: {}]
  %s4 = inlined_call_operand.hbm [shape: f32[2,128], index: 4, kind: output, shape index: {0}]
  %s5 = inlined_call_operand.hbm [shape: f32[2,1024], index: 5, kind: output, shape index: {1}]
  %6 = xla_tuple %s4, %s5
  %s7 = sld [smem:[#allocation0]]
  $region54: #{tpu_custom_call.1} parent=0
    _
  %s9 = ssub.s32 1, %s7
  %s10 = scalar_select 0, %s9, %s7
  $region1: #{tpu_custom_call.1} parent=0
    #allocation2 [shape = 'u8[8192]{0}', space=vmem, size = 0x2000, scoped, tag = 'input window, operand 0, single buffered']
    #allocation3 [shape = 's32[1]{0}', space=sflag, size = 0x4, scoped, tag = 'scoped memory for tpu_custom_call.1']
    #allocation4 [shape = 's32[1]{0}', space=sflag, size = 0x4, scoped, tag = 'scoped memory for tpu_custom_call.1']
    #allocation5 [shape = 'u8[4096]{0}', space=vmem, size = 0x1000, scoped, tag = 'input window, operand 1, single buffered']
    #allocation6 [shape = 's32[1]{0}', space=sflag, size = 0x4, scoped, tag = 'scoped memory for tpu_custom_call.1']
    #allocation7 [shape = 'u8[4096]{0}', space=vmem, size = 0x1000, scoped, tag = 'input window, operand 2, single buffered']
    #allocation8 [shape = 'u8[262144]{0}', space=vmem, size = 0x40000, scoped, tag = 'input window, operand 3, single buffered']
    #allocation9 [shape = 's32[1]{0}', space=sflag, size = 0x4, scoped, tag = 'scoped memory for tpu_custom_call.1']
    #allocation10 [shape = 'u8[1024]{0}', space=vmem, size = 0x400, scoped, tag = 'output window, operand 0, single buffered']
    #allocation11 [shape = 'u8[8192]{0}', space=vmem, size = 0x2000, scoped, tag = 'output window, operand 1, single buffered']
    #allocation12 [shape = 's32[1]{0}', space=sflag, size = 0x4, scoped, tag = 'scoped memory for tpu_custom_call.1']
    %11 = vsyncpa [#allocation3], 0
    %12 = vsyncpa [#allocation6], 0
    %13 = vsyncpa [#allocation9], 0
    %14 = vsyncpa [#allocation4], 0
    %15 = vsyncpa [#allocation12], 0
    // Predicated region
    $region2: #{tpu_custom_call.1} parent=1 // pred_check
      _
    $region3: #{tpu_custom_call.1} parent=1 // pred_check_branch
      %17 = sbr.rel (0) target = $region5
    $region4: #{tpu_custom_call.1} parent=1 // pred_region
      %19 = vsyncadd [#allocation3], 0
      %s21 = sshll.u32 %s0, 4
      %s22 = int_to_ptr.hbm [resolvable:$true] %s21
      %s23 = sshll.u32 [#allocation2], 4
      %s24 = int_to_ptr.vmem [resolvable:$true] %s23
      %26 = dma.hbm_to_vmem [thread:$0]  %s22, 256, %s24, [#allocation3]
    $region5: #{tpu_custom_call.1} parent=1 // pred_fallthru
      _
    // Predicated region
    $region6: #{tpu_custom_call.1} parent=1 // pred_check
      _
    $region7: #{tpu_custom_call.1} parent=1 // pred_check_branch
      %28 = sbr.rel (0) target = $region9
    $region8: #{tpu_custom_call.1} parent=1 // pred_region
      %30 = vsyncadd [#allocation6], 0
      %s32 = sshll.u32 %s1, 4
      %s33 = int_to_ptr.hbm [resolvable:$true] %s32
      %s34 = sshll.u32 [#allocation5], 4
      %s35 = int_to_ptr.vmem [resolvable:$true] %s34
      %37 = dma.hbm_to_vmem [thread:$0]  %s33, 128, %s35, [#allocation6]
    $region9: #{tpu_custom_call.1} parent=1 // pred_fallthru
      _
    // Predicated region
    $region10: #{tpu_custom_call.1} parent=1 // pred_check
      _
    $region11: #{tpu_custom_call.1} parent=1 // pred_check_branch
      %39 = sbr.rel (0) target = $region13
    $region12: #{tpu_custom_call.1} parent=1 // pred_region
      %41 = vsyncadd [#allocation6], 0
      %s43 = sshll.u32 %s2, 4
      %s44 = int_to_ptr.hbm [resolvable:$true] %s43
      %s45 = sshll.u32 [#allocation7], 4
      %s46 = int_to_ptr.vmem [resolvable:$true] %s45
      %48 = dma.hbm_to_vmem [thread:$0]  %s44, 128, %s46, [#allocation6]
    $region13: #{tpu_custom_call.1} parent=1 // pred_fallthru
      _
    // Predicated region
    $region14: #{tpu_custom_call.1} parent=1 // pred_check
      _
    $region15: #{tpu_custom_call.1} parent=1 // pred_check_branch
      %50 = sbr.rel (0) target = $region17
    $region16: #{tpu_custom_call.1} parent=1 // pred_region
      %52 = vsyncadd [#allocation9], 0
      %s53 = sshll.u32 %s3, 4
      %s54 = int_to_ptr.hbm [resolvable:$true] %s53
      %s55 = sshll.u32 [#allocation8], 4
      %s56 = int_to_ptr.vmem [resolvable:$true] %s55
      %61 = dma.hbm_to_vmem [thread:$0]  %s54, 8192, %s56, [#allocation9], 64, 64, 4
    $region17: #{tpu_custom_call.1} parent=1 // pred_fallthru
      _
    // Predicated region
    $region18: #{tpu_custom_call.1} parent=1 // pred_check
      _
    $region19: #{tpu_custom_call.1} parent=1 // pred_check_branch
      %63 = sbr.rel (0) target = $region21
    $region20: #{tpu_custom_call.1} parent=1 // pred_region
      %65 = dma.done [#allocation3], 256
    $region21: #{tpu_custom_call.1} parent=1 // pred_fallthru
      _
    // Predicated region
    $region22: #{tpu_custom_call.1} parent=1 // pred_check
      _
    $region23: #{tpu_custom_call.1} parent=1 // pred_check_branch
      %67 = sbr.rel (0) target = $region25
    $region24: #{tpu_custom_call.1} parent=1 // pred_region
      %69 = dma.done [#allocation6], 128
    $region25: #{tpu_custom_call.1} parent=1 // pred_fallthru
      _
    // Predicated region
    $region26: #{tpu_custom_call.1} parent=1 // pred_check
      _
    $region27: #{tpu_custom_call.1} parent=1 // pred_check_branch
      %71 = sbr.rel (0) target = $region29
    $region28: #{tpu_custom_call.1} parent=1 // pred_region
      %73 = dma.done [#allocation6], 128
    $region29: #{tpu_custom_call.1} parent=1 // pred_fallthru
      _
    // Predicated region
    $region30: #{tpu_custom_call.1} parent=1 // pred_check
      _
    $region31: #{tpu_custom_call.1} parent=1 // pred_check_branch
      %75 = sbr.rel (0) target = $region33
    $region32: #{tpu_custom_call.1} parent=1 // pred_region
      %77 = dma.done [#allocation9], 8192
    $region33: #{tpu_custom_call.1} parent=1 // pred_fallthru
      _
    %v78 = vld [vmem:[#allocation2] sm:$0xff]
    %v79 = vld [vmem:[#allocation2 + $0x8] sm:$0xff]
    %v80 = vld [vmem:[#allocation5] sm:$0xff]
    %v82 = vperm.slane %v80, 0
    %v83 = vperm.slane %v80, 1
    %v84 = vperm.slane %v80, 2
    %v85 = vperm.slane %v80, 3
    %v86 = vperm.slane %v80, 4
    %v87 = vperm.slane %v80, 5
    %v88 = vperm.slane %v80, 6
    %v89 = vperm.slane %v80, 7
    %v90 = vrot.slane %v83, 6
    %v91 = vrot.slane %v84, 4
    %v92 = vrot.slane %v85, 2
    %v93 = vrot.slane %v87, 6
    %v94 = vrot.slane %v88, 4
    %v95 = vrot.slane %v89, 2
    %vm96 = vcmask 1041408
    %v97 = vsel %vm96, %v82, %v90
    %vm98 = vcmask 1045508
    %v99 = vsel %vm98, %v91, %v92
    %vm100 = vcmask 1043456
    %v101 = vsel %vm100, %v97, %v99
    %v102 = vsel %vm96, %v86, %v93
    %v103 = vsel %vm98, %v94, %v95
    %v104 = vsel %vm100, %v102, %v103
    %v107 = vmul.f32 %v78, %v101
    %v108 = vmul.f32 %v79, %v104
    %v109 = vld [vmem:[#allocation7] sm:$0xff]
    %v111 = vperm.slane %v109, 0
    %v112 = vperm.slane %v109, 1
    %v113 = vperm.slane %v109, 2
    %v114 = vperm.slane %v109, 3
    %v115 = vperm.slane %v109, 4
    %v116 = vperm.slane %v109, 5
    %v117 = vperm.slane %v109, 6
    %v118 = vperm.slane %v109, 7
    %v119 = vrot.slane %v112, 6
    %v120 = vrot.slane %v113, 4
    %v121 = vrot.slane %v114, 2
    %v122 = vrot.slane %v116, 6
    %v123 = vrot.slane %v117, 4
    %v124 = vrot.slane %v118, 2
    %v125 = vsel %vm96, %v111, %v119
    %v126 = vsel %vm98, %v120, %v121
    %v127 = vsel %vm100, %v125, %v126
    %v128 = vsel %vm96, %v115, %v122
    %v129 = vsel %vm98, %v123, %v124
    %v130 = vsel %vm100, %v128, %v129
    %v133 = vadd.f32 %v107, %v127
    %v134 = vadd.f32 %v108, %v130
    %137 = vst [vmem:[#allocation1] ss:$4 sm:$0xff] %v133
    %s138 = scalar_lea.vmem [#allocation1], 32
    %139 = vst [vmem:[%s138] ss:$4 sm:$0xff] %v134
    %v140 = vld.sshfl [vmem:[#allocation1] sm:$0xff pattern:$0x73625140]
    %v141 = vld.sshfl [vmem:[#allocation1 + $0x8] sm:$0xff pattern:$0x73625140]
    %v142 = vld.sshfl [vmem:[#allocation1 + $0x10] sm:$0xff pattern:$0x73625140]
    %v143 = vld.sshfl [vmem:[#allocation1 + $0x18] sm:$0xff pattern:$0x73625140]
    %v144 = vld.sshfl [vmem:[#allocation1 + $0x20] sm:$0xff pattern:$0x73625140]
    %v145 = vld.sshfl [vmem:[#allocation1 + $0x28] sm:$0xff pattern:$0x73625140]
    %v146 = vld.sshfl [vmem:[#allocation1 + $0x30] sm:$0xff pattern:$0x73625140]
    %v147 = vld.sshfl [vmem:[#allocation1 + $0x38] sm:$0xff pattern:$0x73625140]
    %v156 = vpack.c.bf16 %v140, %v140
    %v157 = vpack.c.bf16 %v141, %v141
    %v158 = vpack.c.bf16 %v142, %v142
    %v159 = vpack.c.bf16 %v143, %v143
    %v160 = vpack.c.bf16 %v144, %v144
    %v161 = vpack.c.bf16 %v145, %v145
    %v162 = vpack.c.bf16 %v146, %v146
    %v163 = vpack.c.bf16 %v147, %v147
    %v164 = vld [vmem:[#allocation8] sm:$0xf]
    %v165 = vld [vmem:[#allocation8 + $0x4] sm:$0xf]
    %v166 = vld [vmem:[#allocation8 + $0x8] sm:$0xf]
    %v167 = vld [vmem:[#allocation8 + $0xc] sm:$0xf]
    %v168 = vld [vmem:[#allocation8 + $0x10] sm:$0xf]
    %v169 = vld [vmem:[#allocation8 + $0x14] sm:$0xf]
    %v170 = vld [vmem:[#allocation8 + $0x18] sm:$0xf]
    %v171 = vld [vmem:[#allocation8 + $0x1c] sm:$0xf]
    %v172 = vld [vmem:[#allocation8 + $0x20] sm:$0xf]
    %v173 = vld [vmem:[#allocation8 + $0x24] sm:$0xf]
    %v174 = vld [vmem:[#allocation8 + $0x28] sm:$0xf]
    %v175 = vld [vmem:[#allocation8 + $0x2c] sm:$0xf]
    %v176 = vld [vmem:[#allocation8 + $0x30] sm:$0xf]
    %v177 = vld [vmem:[#allocation8 + $0x34] sm:$0xf]
    %v178 = vld [vmem:[#allocation8 + $0x38] sm:$0xf]
    %v179 = vld [vmem:[#allocation8 + $0x3c] sm:$0xf]
    %v180 = vld [vmem:[#allocation8 + $0x40] sm:$0xf]
    %v181 = vld [vmem:[#allocation8 + $0x44] sm:$0xf]
    %v182 = vld [vmem:[#allocation8 + $0x48] sm:$0xf]
    %v183 = vld [vmem:[#allocation8 + $0x4c] sm:$0xf]
    %v184 = vld [vmem:[#allocation8 + $0x50] sm:$0xf]
    %v185 = vld [vmem:[#allocation8 + $0x54] sm:$0xf]
    %v186 = vld [vmem:[#allocation8 + $0x58] sm:$0xf]
    %v187 = vld [vmem:[#allocation8 + $0x5c] sm:$0xf]
    %v188 = vld [vmem:[#allocation8 + $0x60] sm:$0xf]
    %v189 = vld [vmem:[#allocation8 + $0x64] sm:$0xf]
    %v190 = vld [vmem:[#allocation8 + $0x68] sm:$0xf]
    %v191 = vld [vmem:[#allocation8 + $0x6c] sm:$0xf]
    %v192 = vld [vmem:[#allocation8 + $0x70] sm:$0xf]
    %v193 = vld [vmem:[#allocation8 + $0x74] sm:$0xf]
    %v194 = vld [vmem:[#allocation8 + $0x78] sm:$0xf]
    %v195 = vld [vmem:[#allocation8 + $0x7c] sm:$0xf]
    %v196 = vld [vmem:[#allocation8 + $0x80] sm:$0xf]
    %v197 = vld [vmem:[#allocation8 + $0x84] sm:$0xf]
    %v198 = vld [vmem:[#allocation8 + $0x88] sm:$0xf]
    %v199 = vld [vmem:[#allocation8 + $0x8c] sm:$0xf]
    %v200 = vld [vmem:[#allocation8 + $0x90] sm:$0xf]
    %v201 = vld [vmem:[#allocation8 + $0x94] sm:$0xf]
    %v202 = vld [vmem:[#allocation8 + $0x98] sm:$0xf]
    %v203 = vld [vmem:[#allocation8 + $0x9c] sm:$0xf]
    %v204 = vld [vmem:[#allocation8 + $0xa0] sm:$0xf]
    %v205 = vld [vmem:[#allocation8 + $0xa4] sm:$0xf]
    %v206 = vld [vmem:[#allocation8 + $0xa8] sm:$0xf]
    %v207 = vld [vmem:[#allocation8 + $0xac] sm:$0xf]
    %v208 = vld [vmem:[#allocation8 + $0xb0] sm:$0xf]
    %v209 = vld [vmem:[#allocation8 + $0xb4] sm:$0xf]
    %v210 = vld [vmem:[#allocation8 + $0xb8] sm:$0xf]
    %v211 = vld [vmem:[#allocation8 + $0xbc] sm:$0xf]
    %v212 = vld [vmem:[#allocation8 + $0xc0] sm:$0xf]
    %v213 = vld [vmem:[#allocation8 + $0xc4] sm:$0xf]
    %v214 = vld [vmem:[#allocation8 + $0xc8] sm:$0xf]
    %v215 = vld [vmem:[#allocation8 + $0xcc] sm:$0xf]
    %v216 = vld [vmem:[#allocation8 + $0xd0] sm:$0xf]
    %v217 = vld [vmem:[#allocation8 + $0xd4] sm:$0xf]
    %v218 = vld [vmem:[#allocation8 + $0xd8] sm:$0xf]
    %v219 = vld [vmem:[#allocation8 + $0xdc] sm:$0xf]
    %v220 = vld [vmem:[#allocation8 + $0xe0] sm:$0xf]
    %v221 = vld [vmem:[#allocation8 + $0xe4] sm:$0xf]
    %v222 = vld [vmem:[#allocation8 + $0xe8] sm:$0xf]
    %v223 = vld [vmem:[#allocation8 + $0xec] sm:$0xf]
    %v224 = vld [vmem:[#allocation8 + $0xf0] sm:$0xf]
    %v225 = vld [vmem:[#allocation8 + $0xf4] sm:$0xf]
    %v226 = vld [vmem:[#allocation8 + $0xf8] sm:$0xf]
    %v227 = vld [vmem:[#allocation8 + $0xfc] sm:$0xf]
    %v228 = vld [vmem:[#allocation8 + $0x100] sm:$0xf]
    %v229 = vld [vmem:[#allocation8 + $0x104] sm:$0xf]
    %v230 = vld [vmem:[#allocation8 + $0x108] sm:$0xf]
    %v231 = vld [vmem:[#allocation8 + $0x10c] sm:$0xf]
    %v232 = vld [vmem:[#allocation8 + $0x110] sm:$0xf]
    %v233 = vld [vmem:[#allocation8 + $0x114] sm:$0xf]
    %v234 = vld [vmem:[#allocation8 + $0x118] sm:$0xf]
    %v235 = vld [vmem:[#allocation8 + $0x11c] sm:$0xf]
    %v236 = vld [vmem:[#allocation8 + $0x120] sm:$0xf]
    %v237 = vld [vmem:[#allocation8 + $0x124] sm:$0xf]
    %v238 = vld [vmem:[#allocation8 + $0x128] sm:$0xf]
    %v239 = vld [vmem:[#allocation8 + $0x12c] sm:$0xf]
    %v240 = vld [vmem:[#allocation8 + $0x130] sm:$0xf]
    %v241 = vld [vmem:[#allocation8 + $0x134] sm:$0xf]
    %v242 = vld [vmem:[#allocation8 + $0x138] sm:$0xf]
    %v243 = vld [vmem:[#allocation8 + $0x13c] sm:$0xf]
    %v244 = vld [vmem:[#allocation8 + $0x140] sm:$0xf]
    %v245 = vld [vmem:[#allocation8 + $0x144] sm:$0xf]
    %v246 = vld [vmem:[#allocation8 + $0x148] sm:$0xf]
    %v247 = vld [vmem:[#allocation8 + $0x14c] sm:$0xf]
    %v248 = vld [vmem:[#allocation8 + $0x150] sm:$0xf]
    %v249 = vld [vmem:[#allocation8 + $0x154] sm:$0xf]
    %v250 = vld [vmem:[#allocation8 + $0x158] sm:$0xf]
    %v251 = vld [vmem:[#allocation8 + $0x15c] sm:$0xf]
    %v252 = vld [vmem:[#allocation8 + $0x160] sm:$0xf]
    %v253 = vld [vmem:[#allocation8 + $0x164] sm:$0xf]
    %v254 = vld [vmem:[#allocation8 + $0x168] sm:$0xf]
    %v255 = vld [vmem:[#allocation8 + $0x16c] sm:$0xf]
    %v256 = vld [vmem:[#allocation8 + $0x170] sm:$0xf]
    %v257 = vld [vmem:[#allocation8 + $0x174] sm:$0xf]
    %v258 = vld [vmem:[#allocation8 + $0x178] sm:$0xf]
    %v259 = vld [vmem:[#allocation8 + $0x17c] sm:$0xf]
    %v260 = vld [vmem:[#allocation8 + $0x180] sm:$0xf]
    %v261 = vld [vmem:[#allocation8 + $0x184] sm:$0xf]
    %v262 = vld [vmem:[#allocation8 + $0x188] sm:$0xf]
    %v263 = vld [vmem:[#allocation8 + $0x18c] sm:$0xf]
    %v264 = vld [vmem:[#allocation8 + $0x190] sm:$0xf]
    %v265 = vld [vmem:[#allocation8 + $0x194] sm:$0xf]
    %v266 = vld [vmem:[#allocation8 + $0x198] sm:$0xf]
    %v267 = vld [vmem:[#allocation8 + $0x19c] sm:$0xf]
    %v268 = vld [vmem:[#allocation8 + $0x1a0] sm:$0xf]
    %v269 = vld [vmem:[#allocation8 + $0x1a4] sm:$0xf]
    %v270 = vld [vmem:[#allocation8 + $0x1a8] sm:$0xf]
    %v271 = vld [vmem:[#allocation8 + $0x1ac] sm:$0xf]
    %v272 = vld [vmem:[#allocation8 + $0x1b0] sm:$0xf]
    %v273 = vld [vmem:[#allocation8 + $0x1b4] sm:$0xf]
    %v274 = vld [vmem:[#allocation8 + $0x1b8] sm:$0xf]
    %v275 = vld [vmem:[#allocation8 + $0x1bc] sm:$0xf]
    %v276 = vld [vmem:[#allocation8 + $0x1c0] sm:$0xf]
    %v277 = vld [vmem:[#allocation8 + $0x1c4] sm:$0xf]
    %v278 = vld [vmem:[#allocation8 + $0x1c8] sm:$0xf]
    %v279 = vld [vmem:[#allocation8 + $0x1cc] sm:$0xf]
    %v280 = vld [vmem:[#allocation8 + $0x1d0] sm:$0xf]
    %v281 = vld [vmem:[#allocation8 + $0x1d4] sm:$0xf]
    %v282 = vld [vmem:[#allocation8 + $0x1d8] sm:$0xf]
    %v283 = vld [vmem:[#allocation8 + $0x1dc] sm:$0xf]
    %v284 = vld [vmem:[#allocation8 + $0x1e0] sm:$0xf]
    %v285 = vld [vmem:[#allocation8 + $0x1e4] sm:$0xf]
    %v286 = vld [vmem:[#allocation8 + $0x1e8] sm:$0xf]
    %v287 = vld [vmem:[#allocation8 + $0x1ec] sm:$0xf]
    %v288 = vld [vmem:[#allocation8 + $0x1f0] sm:$0xf]
    %v289 = vld [vmem:[#allocation8 + $0x1f4] sm:$0xf]
    %v290 = vld [vmem:[#allocation8 + $0x1f8] sm:$0xf]
    %v291 = vld [vmem:[#allocation8 + $0x1fc] sm:$0xf]
    %v420 = vunpack.c.l.b16 %v164
    %v421 = vunpack.c.l.b16 %v165
    %v422 = vunpack.c.l.b16 %v166
    %v423 = vunpack.c.l.b16 %v167
    %v424 = vunpack.c.l.b16 %v168
    %v425 = vunpack.c.l.b16 %v169
    %v426 = vunpack.c.l.b16 %v170
    %v427 = vunpack.c.l.b16 %v171
    %v428 = vunpack.c.l.b16 %v172
    %v429 = vunpack.c.l.b16 %v173
    %v430 = vunpack.c.l.b16 %v174
    %v431 = vunpack.c.l.b16 %v175
    %v432 = vunpack.c.l.b16 %v176
    %v433 = vunpack.c.l.b16 %v177
    %v434 = vunpack.c.l.b16 %v178
    %v435 = vunpack.c.l.b16 %v179
    %v436 = vunpack.c.l.b16 %v180
    %v437 = vunpack.c.l.b16 %v181
    %v438 = vunpack.c.l.b16 %v182
    %v439 = vunpack.c.l.b16 %v183
    %v440 = vunpack.c.l.b16 %v184
    %v441 = vunpack.c.l.b16 %v185
    %v442 = vunpack.c.l.b16 %v186
    %v443 = vunpack.c.l.b16 %v187
    %v444 = vunpack.c.l.b16 %v188
    %v445 = vunpack.c.l.b16 %v189
    %v446 = vunpack.c.l.b16 %v190
    %v447 = vunpack.c.l.b16 %v191
    %v448 = vunpack.c.l.b16 %v192
    %v449 = vunpack.c.l.b16 %v193
    %v450 = vunpack.c.l.b16 %v194
    %v451 = vunpack.c.l.b16 %v195
    %v452 = vunpack.c.l.b16 %v196
    %v453 = vunpack.c.l.b16 %v197
    %v454 = vunpack.c.l.b16 %v198
    %v455 = vunpack.c.l.b16 %v199
    %v456 = vunpack.c.l.b16 %v200
    %v457 = vunpack.c.l.b16 %v201
    %v458 = vunpack.c.l.b16 %v202
    %v459 = vunpack.c.l.b16 %v203
    %v460 = vunpack.c.l.b16 %v204
    %v461 = vunpack.c.l.b16 %v205
    %v462 = vunpack.c.l.b16 %v206
    %v463 = vunpack.c.l.b16 %v207
    %v464 = vunpack.c.l.b16 %v208
    %v465 = vunpack.c.l.b16 %v209
    %v466 = vunpack.c.l.b16 %v210
    %v467 = vunpack.c.l.b16 %v211
    %v468 = vunpack.c.l.b16 %v212
    %v469 = vunpack.c.l.b16 %v213
    %v470 = vunpack.c.l.b16 %v214
    %v471 = vunpack.c.l.b16 %v215
    %v472 = vunpack.c.l.b16 %v216
    %v473 = vunpack.c.l.b16 %v217
    %v474 = vunpack.c.l.b16 %v218
    %v475 = vunpack.c.l.b16 %v219
    %v476 = vunpack.c.l.b16 %v220
    %v477 = vunpack.c.l.b16 %v221
    %v478 = vunpack.c.l.b16 %v222
    %v479 = vunpack.c.l.b16 %v223
    %v480 = vunpack.c.l.b16 %v224
    %v481 = vunpack.c.l.b16 %v225
    %v482 = vunpack.c.l.b16 %v226
    %v483 = vunpack.c.l.b16 %v227
    %v484 = vunpack.c.l.b16 %v228
    %v485 = vunpack.c.l.b16 %v229
    %v486 = vunpack.c.l.b16 %v230
    %v487 = vunpack.c.l.b16 %v231
    %v488 = vunpack.c.l.b16 %v232
    %v489 = vunpack.c.l.b16 %v233
    %v490 = vunpack.c.l.b16 %v234
    %v491 = vunpack.c.l.b16 %v235
    %v492 = vunpack.c.l.b16 %v236
    %v493 = vunpack.c.l.b16 %v237
    %v494 = vunpack.c.l.b16 %v238
    %v495 = vunpack.c.l.b16 %v239
    %v496 = vunpack.c.l.b16 %v240
    %v497 = vunpack.c.l.b16 %v241
    %v498 = vunpack.c.l.b16 %v242
    %v499 = vunpack.c.l.b16 %v243
    %v500 = vunpack.c.l.b16 %v244
    %v501 = vunpack.c.l.b16 %v245
    %v502 = vunpack.c.l.b16 %v246
    %v503 = vunpack.c.l.b16 %v247
    %v504 = vunpack.c.l.b16 %v248
    %v505 = vunpack.c.l.b16 %v249
    %v506 = vunpack.c.l.b16 %v250
    %v507 = vunpack.c.l.b16 %v251
    %v508 = vunpack.c.l.b16 %v252
    %v509 = vunpack.c.l.b16 %v253
    %v510 = vunpack.c.l.b16 %v254
    %v511 = vunpack.c.l.b16 %v255
    %v512 = vunpack.c.l.b16 %v256
    %v513 = vunpack.c.l.b16 %v257
    %v514 = vunpack.c.l.b16 %v258
    %v515 = vunpack.c.l.b16 %v259
    %v516 = vunpack.c.l.b16 %v260
    %v517 = vunpack.c.l.b16 %v261
    %v518 = vunpack.c.l.b16 %v262
    %v519 = vunpack.c.l.b16 %v263
    %v520 = vunpack.c.l.b16 %v264
    %v521 = vunpack.c.l.b16 %v265
    %v522 = vunpack.c.l.b16 %v266
    %v523 = vunpack.c.l.b16 %v267
    %v524 = vunpack.c.l.b16 %v268
    %v525 = vunpack.c.l.b16 %v269
    %v526 = vunpack.c.l.b16 %v270
    %v527 = vunpack.c.l.b16 %v271
    %v528 = vunpack.c.l.b16 %v272
    %v529 = vunpack.c.l.b16 %v273
    %v530 = vunpack.c.l.b16 %v274
    %v531 = vunpack.c.l.b16 %v275
    %v532 = vunpack.c.l.b16 %v276
    %v533 = vunpack.c.l.b16 %v277
    %v534 = vunpack.c.l.b16 %v278
    %v535 = vunpack.c.l.b16 %v279
    %v536 = vunpack.c.l.b16 %v280
    %v537 = vunpack.c.l.b16 %v281
    %v538 = vunpack.c.l.b16 %v282
    %v539 = vunpack.c.l.b16 %v283
    %v540 = vunpack.c.l.b16 %v284
    %v541 = vunpack.c.l.b16 %v285
    %v542 = vunpack.c.l.b16 %v286
    %v543 = vunpack.c.l.b16 %v287
    %v544 = vunpack.c.l.b16 %v288
    %v545 = vunpack.c.l.b16 %v289
    %v546 = vunpack.c.l.b16 %v290
    %v547 = vunpack.c.l.b16 %v291
    %v548 = vpack.c.b16 %v421, %v420
    %v549 = vpack.c.b16 %v423, %v422
    %v550 = vpack.c.b16 %v425, %v424
    %v551 = vpack.c.b16 %v427, %v426
    %v552 = vpack.c.b16 %v429, %v428
    %v553 = vpack.c.b16 %v431, %v430
    %v554 = vpack.c.b16 %v433, %v432
    %v555 = vpack.c.b16 %v435, %v434
    %v556 = vpack.c.b16 %v437, %v436
    %v557 = vpack.c.b16 %v439, %v438
    %v558 = vpack.c.b16 %v441, %v440
    %v559 = vpack.c.b16 %v443, %v442
    %v560 = vpack.c.b16 %v445, %v444
    %v561 = vpack.c.b16 %v447, %v446
    %v562 = vpack.c.b16 %v449, %v448
    %v563 = vpack.c.b16 %v451, %v450
    %v564 = vpack.c.b16 %v453, %v452
    %v565 = vpack.c.b16 %v455, %v454
    %v566 = vpack.c.b16 %v457, %v456
    %v567 = vpack.c.b16 %v459, %v458
    %v568 = vpack.c.b16 %v461, %v460
    %v569 = vpack.c.b16 %v463, %v462
    %v570 = vpack.c.b16 %v465, %v464
    %v571 = vpack.c.b16 %v467, %v466
    %v572 = vpack.c.b16 %v469, %v468
    %v573 = vpack.c.b16 %v471, %v470
    %v574 = vpack.c.b16 %v473, %v472
    %v575 = vpack.c.b16 %v475, %v474
    %v576 = vpack.c.b16 %v477, %v476
    %v577 = vpack.c.b16 %v479, %v478
    %v578 = vpack.c.b16 %v481, %v480
    %v579 = vpack.c.b16 %v483, %v482
    %v580 = vpack.c.b16 %v485, %v484
    %v581 = vpack.c.b16 %v487, %v486
    %v582 = vpack.c.b16 %v489, %v488
    %v583 = vpack.c.b16 %v491, %v490
    %v584 = vpack.c.b16 %v493, %v492
    %v585 = vpack.c.b16 %v495, %v494
    %v586 = vpack.c.b16 %v497, %v496
    %v587 = vpack.c.b16 %v499, %v498
    %v588 = vpack.c.b16 %v501, %v500
    %v589 = vpack.c.b16 %v503, %v502
    %v590 = vpack.c.b16 %v505, %v504
    %v591 = vpack.c.b16 %v507, %v506
    %v592 = vpack.c.b16 %v509, %v508
    %v593 = vpack.c.b16 %v511, %v510
    %v594 = vpack.c.b16 %v513, %v512
    %v595 = vpack.c.b16 %v515, %v514
    %v596 = vpack.c.b16 %v517, %v516
    %v597 = vpack.c.b16 %v519, %v518
    %v598 = vpack.c.b16 %v521, %v520
    %v599 = vpack.c.b16 %v523, %v522
    %v600 = vpack.c.b16 %v525, %v524
    %v601 = vpack.c.b16 %v527, %v526
    %v602 = vpack.c.b16 %v529, %v528
    %v603 = vpack.c.b16 %v531, %v530
    %v604 = vpack.c.b16 %v533, %v532
    %v605 = vpack.c.b16 %v535, %v534
    %v606 = vpack.c.b16 %v537, %v536
    %v607 = vpack.c.b16 %v539, %v538
    %v608 = vpack.c.b16 %v541, %v540
    %v609 = vpack.c.b16 %v543, %v542
    %v610 = vpack.c.b16 %v545, %v544
    %v611 = vpack.c.b16 %v547, %v546
    %676 = vmatpush.bf16.msra.mxu0 %v555
    %677 = vmatpush.bf16.msra.mxu0 %v554
    %678 = vmatpush.bf16.msra.mxu0 %v553
    %679 = vmatpush.bf16.msra.mxu0 %v552
    %680 = vmatpush.bf16.msra.mxu0 %v551
    %681 = vmatpush.bf16.msra.mxu0 %v550
    %682 = vmatpush.bf16.msra.mxu0 %v549
    %683 = vmatpush.bf16.msra.mxu0 %v548
    %684 = vmatmul.bf16.gmra.mxu0 %v156
    %v685 = vpop.f32.mrf.mxu0
    %v686 = vadd.f32 0.0, %v685
    %v687 = vpop.f32.mrf.mxu0
    %688 = vdwg.mxu0
    %689 = vmatpush.bf16.msra.mxu0 %v563
    %690 = vmatpush.bf16.msra.mxu0 %v562
    %691 = vmatpush.bf16.msra.mxu0 %v561
    %692 = vmatpush.bf16.msra.mxu0 %v560
    %693 = vmatpush.bf16.msra.mxu0 %v559
    %694 = vmatpush.bf16.msra.mxu0 %v558
    %695 = vmatpush.bf16.msra.mxu0 %v557
    %696 = vmatpush.bf16.msra.mxu0 %v556
    %697 = vmatmul.bf16.gmra.mxu0 %v157
    %v698 = vpop.f32.mrf.mxu0
    %v699 = vadd.f32 %v686, %v698
    %v700 = vpop.f32.mrf.mxu0
    %701 = vdwg.mxu0
    %702 = vmatpush.bf16.msra.mxu0 %v571
    %703 = vmatpush.bf16.msra.mxu0 %v570
    %704 = vmatpush.bf16.msra.mxu0 %v569
    %705 = vmatpush.bf16.msra.mxu0 %v568
    %706 = vmatpush.bf16.msra.mxu0 %v567
    %707 = vmatpush.bf16.msra.mxu0 %v566
    %708 = vmatpush.bf16.msra.mxu0 %v565
    %709 = vmatpush.bf16.msra.mxu0 %v564
    %710 = vmatmul.bf16.gmra.mxu0 %v158
    %v711 = vpop.f32.mrf.mxu0
    %v712 = vadd.f32 %v699, %v711
    %v713 = vpop.f32.mrf.mxu0
    %714 = vdwg.mxu0
    %715 = vmatpush.bf16.msra.mxu0 %v579
    %716 = vmatpush.bf16.msra.mxu0 %v578
    %717 = vmatpush.bf16.msra.mxu0 %v577
    %718 = vmatpush.bf16.msra.mxu0 %v576
    %719 = vmatpush.bf16.msra.mxu0 %v575
    %720 = vmatpush.bf16.msra.mxu0 %v574
    %721 = vmatpush.bf16.msra.mxu0 %v573
    %722 = vmatpush.bf16.msra.mxu0 %v572
    %723 = vmatmul.bf16.gmra.mxu0 %v159
    %v724 = vpop.f32.mrf.mxu0
    %v725 = vadd.f32 %v712, %v724
    %v726 = vpop.f32.mrf.mxu0
    %727 = vdwg.mxu0
    %728 = vmatpush.bf16.msra.mxu0 %v587
    %729 = vmatpush.bf16.msra.mxu0 %v586
    %730 = vmatpush.bf16.msra.mxu0 %v585
    %731 = vmatpush.bf16.msra.mxu0 %v584
    %732 = vmatpush.bf16.msra.mxu0 %v583
    %733 = vmatpush.bf16.msra.mxu0 %v582
    %734 = vmatpush.bf16.msra.mxu0 %v581
    %735 = vmatpush.bf16.msra.mxu0 %v580
    %736 = vmatmul.bf16.gmra.mxu0 %v160
    %v737 = vpop.f32.mrf.mxu0
    %v738 = vadd.f32 %v725, %v737
    %v739 = vpop.f32.mrf.mxu0
    %740 = vdwg.mxu0
    %741 = vmatpush.bf16.msra.mxu0 %v595
    %742 = vmatpush.bf16.msra.mxu0 %v594
    %743 = vmatpush.bf16.msra.mxu0 %v593
    %744 = vmatpush.bf16.msra.mxu0 %v592
    %745 = vmatpush.bf16.msra.mxu0 %v591
    %746 = vmatpush.bf16.msra.mxu0 %v590
    %747 = vmatpush.bf16.msra.mxu0 %v589
    %748 = vmatpush.bf16.msra.mxu0 %v588
    %749 = vmatmul.bf16.gmra.mxu0 %v161
    %v750 = vpop.f32.mrf.mxu0
    %v751 = vadd.f32 %v738, %v750
    %v752 = vpop.f32.mrf.mxu0
    %753 = vdwg.mxu0
    %754 = vmatpush.bf16.msra.mxu0 %v603
    %755 = vmatpush.bf16.msra.mxu0 %v602
    %756 = vmatpush.bf16.msra.mxu0 %v601
    %757 = vmatpush.bf16.msra.mxu0 %v600
    %758 = vmatpush.bf16.msra.mxu0 %v599
    %759 = vmatpush.bf16.msra.mxu0 %v598
    %760 = vmatpush.bf16.msra.mxu0 %v597
    %761 = vmatpush.bf16.msra.mxu0 %v596
    %762 = vmatmul.bf16.gmra.mxu0 %v162
    %v763 = vpop.f32.mrf.mxu0
    %v764 = vadd.f32 %v751, %v763
    %v765 = vpop.f32.mrf.mxu0
    %766 = vdwg.mxu0
    %767 = vmatpush.bf16.msra.mxu0 %v611
    %768 = vmatpush.bf16.msra.mxu0 %v610
    %769 = vmatpush.bf16.msra.mxu0 %v609
    %770 = vmatpush.bf16.msra.mxu0 %v608
    %771 = vmatpush.bf16.msra.mxu0 %v607
    %772 = vmatpush.bf16.msra.mxu0 %v606
    %773 = vmatpush.bf16.msra.mxu0 %v605
    %774 = vmatpush.bf16.msra.mxu0 %v604
    %775 = vmatmul.bf16.gmra.mxu0 %v163
    %v776 = vpop.f32.mrf.mxu0
    %v777 = vadd.f32 %v764, %v776
    %v778 = vpop.f32.mrf.mxu0
    %779 = vdwg.mxu0
    %780 = vst [vmem:[#allocation10] sm:$0x3] %v777
    %p781 = scmp.eq.s32.totalorder 0, 0
    // Predicated region
    $region34: #{tpu_custom_call.1} parent=1 // pred_check
      %p782 = pneg %p781
    $region35: #{tpu_custom_call.1} parent=1 // pred_check_branch
      %784 = sbr.rel (%p782) target = $region37
    $region36: #{tpu_custom_call.1} parent=1 // pred_region
      %v785 = vmul.f32 %v78, %v78
      %v786 = vmul.f32 %v79, %v79
      %789 = vst [vmem:[#allocation1] ss:$4 sm:$0xff] %v785
      %s790 = scalar_lea.vmem [#allocation1], 32
      %791 = vst [vmem:[%s790] ss:$4 sm:$0xff] %v786
      %v792 = vld.sshfl [vmem:[#allocation1] sm:$0xff pattern:$0x73625140]
      %v793 = vld.sshfl [vmem:[#allocation1 + $0x8] sm:$0xff pattern:$0x73625140]
      %v794 = vld.sshfl [vmem:[#allocation1 + $0x10] sm:$0xff pattern:$0x73625140]
      %v795 = vld.sshfl [vmem:[#allocation1 + $0x18] sm:$0xff pattern:$0x73625140]
      %v796 = vld.sshfl [vmem:[#allocation1 + $0x20] sm:$0xff pattern:$0x73625140]
      %v797 = vld.sshfl [vmem:[#allocation1 + $0x28] sm:$0xff pattern:$0x73625140]
      %v798 = vld.sshfl [vmem:[#allocation1 + $0x30] sm:$0xff pattern:$0x73625140]
      %v799 = vld.sshfl [vmem:[#allocation1 + $0x38] sm:$0xff pattern:$0x73625140]
      %v808 = vsel %vm96, %v792, 0.0
      %v809 = vsel %vm96, %v793, 0.0
      %v810 = vadd.f32 %v808, %v809
      %v811 = vsel %vm96, %v794, 0.0
      %v812 = vadd.f32 %v810, %v811
      %v813 = vsel %vm96, %v795, 0.0
      %v814 = vadd.f32 %v812, %v813
      %v815 = vsel %vm96, %v796, 0.0
      %v816 = vadd.f32 %v814, %v815
      %v817 = vsel %vm96, %v797, 0.0
      %v818 = vadd.f32 %v816, %v817
      %v819 = vsel %vm96, %v798, 0.0
      %v820 = vadd.f32 %v818, %v819
      %v821 = vsel %vm96, %v799, 0.0
      %v822 = vadd.f32 %v820, %v821
      %823 = vadd.xlane.f32.xlu0 %v822
      %v824 = vpop.xlane.xlu0 %823
      %v825 = vmax.f32 %v824, 1e-30
      %v826 = vrsqrt.pop %v825
      %v827 = vmul.f32 %v826, %v825
      %v828 = vmul.f32 %v827, %v826
      %v829 = vmul.f32 0.5, %v828
      %v830 = vsub.f32 1.5, %v829
      %v831 = vmul.f32 %v826, %v830
      %vm832 = vweird.f32 %v825
      %vm833 = vweird.f32 %v826
      %vm834 = vmor %vm832, %vm833
      %v835 = vsel %vm834, %v826, %v831
      %v838 = vunpack.c.l.s4 269488144
      %v839 = vunpack.c.0.s8 %v838
      %v840 = vperm.slane %v835, %v839
      %v842 = vmul.f32 %v78, %v840
      %v843 = vmul.f32 %v79, %v840
      %844 = vst [vmem:[#allocation11] sm:$0xff] %v842
      %845 = vst [vmem:[#allocation11 + $0x8] sm:$0xff] %v843
    $region37: #{tpu_custom_call.1} parent=1 // pred_fallthru
      _
    // Predicated region
    $region38: #{tpu_custom_call.1} parent=1 // pred_check
      _
    $region39: #{tpu_custom_call.1} parent=1 // pred_check_branch
      %847 = sbr.rel (0) target = $region41
    $region40: #{tpu_custom_call.1} parent=1 // pred_region
      %849 = vsyncadd [#allocation4], 0
      %s851 = sshll.u32 [#allocation10], 4
      %s852 = int_to_ptr.vmem [resolvable:$true] %s851
      %s853 = sshll.u32 %s4, 4
      %s854 = int_to_ptr.hbm [resolvable:$true] %s853
      %856 = dma.vmem_to_hbm [thread:$0]  %s852, 32, %s854, [#allocation4]
    $region41: #{tpu_custom_call.1} parent=1 // pred_fallthru
      _
    // Predicated region
    $region42: #{tpu_custom_call.1} parent=1 // pred_check
      _
    $region43: #{tpu_custom_call.1} parent=1 // pred_check_branch
      %858 = sbr.rel (0) target = $region45
    $region44: #{tpu_custom_call.1} parent=1 // pred_region
      %860 = vsyncadd [#allocation12], 0
      %s862 = sshll.u32 [#allocation11], 4
      %s863 = int_to_ptr.vmem [resolvable:$true] %s862
      %s864 = sshll.u32 %s5, 4
      %s865 = int_to_ptr.hbm [resolvable:$true] %s864
      %867 = dma.vmem_to_hbm [thread:$0]  %s863, 256, %s865, [#allocation12]
    $region45: #{tpu_custom_call.1} parent=1 // pred_fallthru
      _
    // Predicated region
    $region46: #{tpu_custom_call.1} parent=1 // pred_check
      _
    $region47: #{tpu_custom_call.1} parent=1 // pred_check_branch
      %869 = sbr.rel (0) target = $region49
    $region48: #{tpu_custom_call.1} parent=1 // pred_region
      %871 = dma.done [#allocation4], 32
    $region49: #{tpu_custom_call.1} parent=1 // pred_fallthru
      _
    // Predicated region
    $region50: #{tpu_custom_call.1} parent=1 // pred_check
      _
    $region51: #{tpu_custom_call.1} parent=1 // pred_check_branch
      %873 = sbr.rel (0) target = $region53
    $region52: #{tpu_custom_call.1} parent=1 // pred_region
      %875 = dma.done [#allocation12], 256
    $region53: #{tpu_custom_call.1} parent=1 // pred_fallthru
      _
    %876 = vsyncpa [#allocation3], 1
    %877 = vsyncpa [#allocation6], 1
    %878 = vsyncpa [#allocation9], 1
    %879 = vsyncpa [#allocation4], 1
    %880 = vsyncpa [#allocation12], 1

</llo_original>
